<compile_context>
chip_gen: v7x
topology: tpu7x:2x2x1
jax: 0.10.0
libtpu: 0.0.40
codegen_flags: <defaults>
</compile_context>

<pallas_src>
import functools

import jax
import jax.numpy as jnp
from jax.experimental import pallas as pl
from jax.experimental.pallas import tpu as pltpu


def _leaky_relu(v, negative_slope=0.2):
    return jnp.where(v > 0, v, negative_slope * v)


def _decoder_kernel_4(x_ref,
                      w1_ref, b1_ref,
                      w2_ref, b2_ref,
                      w3_ref, b3_ref,
                      w4_ref, b4_ref,
                      wo_ref, bo_ref,
                      o_ref):
    """Decoder forward with the extra fourth layer (IMG_SIZE != 32)."""
    h = _leaky_relu(
        jnp.dot(x_ref[...], w1_ref[...], preferred_element_type=jnp.float32)
        + b1_ref[...])
    h = _leaky_relu(
        jnp.dot(h, w2_ref[...], preferred_element_type=jnp.float32)
        + b2_ref[...])
    h = _leaky_relu(
        jnp.dot(h, w3_ref[...], preferred_element_type=jnp.float32)
        + b3_ref[...])
    h = _leaky_relu(
        jnp.dot(h, w4_ref[...], preferred_element_type=jnp.float32)
        + b4_ref[...])
    logits = (jnp.dot(h, wo_ref[...], preferred_element_type=jnp.float32)
              + bo_ref[...])
    o_ref[...] = jax.nn.sigmoid(logits).astype(o_ref.dtype)


def _decoder_kernel_3(x_ref,
                      w1_ref, b1_ref,
                      w2_ref, b2_ref,
                      w3_ref, b3_ref,
                      wo_ref, bo_ref,
                      o_ref):
    """Decoder forward without the fourth layer (IMG_SIZE == 32)."""
    h = _leaky_relu(
        jnp.dot(x_ref[...], w1_ref[...], preferred_element_type=jnp.float32)
        + b1_ref[...])
    h = _leaky_relu(
        jnp.dot(h, w2_ref[...], preferred_element_type=jnp.float32)
        + b2_ref[...])
    h = _leaky_relu(
        jnp.dot(h, w3_ref[...], preferred_element_type=jnp.float32)
        + b3_ref[...])
    logits = (jnp.dot(h, wo_ref[...], preferred_element_type=jnp.float32)
              + bo_ref[...])
    o_ref[...] = jax.nn.sigmoid(logits).astype(o_ref.dtype)


def init_decoder_params(key, dimensions_latent, dimensions_hidden,
                        output_dimensions, img_size):
    """Deterministic parameter init (PyTorch nn.Linear-style uniform bounds).

    Weights are stored as [in_features, out_features] (already transposed
    relative to torch's [out, in]), biases as [1, out_features].
    """
    def linear(key, fan_in, fan_out):
        kw, kb = jax.random.split(key)
        bound = 1.0 / jnp.sqrt(float(fan_in))
        w = jax.random.uniform(kw, (fan_in, fan_out), jnp.float32,
                               minval=-bound, maxval=bound)
        b = jax.random.uniform(kb, (1, fan_out), jnp.float32,
                               minval=-bound, maxval=bound)
        return w, b

    keys = jax.random.split(key, 5)
    params = []
    params.append(linear(keys[0], dimensions_latent, dimensions_hidden))
    params.append(linear(keys[1], dimensions_hidden, dimensions_hidden))
    params.append(linear(keys[2], dimensions_hidden, dimensions_hidden))
    if img_size != 32:
        params.append(linear(keys[3], dimensions_hidden, dimensions_hidden))
    params.append(linear(keys[4], dimensions_hidden, output_dimensions))
    return params


def _round_up(x, m):
    return ((x + m - 1) // m) * m


# Max rows per batch tile.  Double-buffered f32 in/out tiles at TB=1024 with a
# 896-lane padded output cost ~2*1024*(16+896)*4 ≈ 7.1 MiB, well inside the
# 16 MiB v5e scoped-VMEM default (and trivially inside v6e/v7x budgets).
_MAX_TB = 1024


@functools.partial(jax.jit, static_argnames=("img_size",))
def decoder_forward(x, params, img_size):
    """x: [batch, dimensions_latent] float32 -> [batch, output_dimensions]."""
    batch, latent = x.shape
    hidden = params[0][0].shape[1]
    out_dims = params[-1][0].shape[1]
    n_hidden = len(params) - 1

    # ---- lane-dense output: pad output width up to a multiple of 128 ----
    out_pad = _round_up(out_dims, 128)
    wo, bo = params[-1]
    if out_pad != out_dims:
        wo = jnp.pad(wo, ((0, 0), (0, out_pad - out_dims)))
        bo = jnp.pad(bo, ((0, 0), (0, out_pad - out_dims)))

    # ---- batch tiling ----
    tb = min(_MAX_TB, _round_up(batch, 8))
    padded_batch = _round_up(batch, tb)
    if padded_batch != batch:
        x = jnp.pad(x, ((0, padded_batch - batch), (0, 0)))
    grid = (padded_batch // tb,)

    flat_params = []
    for w, b in params[:-1]:
        flat_params.extend([w, b])
    flat_params.extend([wo, bo])

    kernel = _decoder_kernel_4 if n_hidden == 4 else _decoder_kernel_3

    # x / out move with the batch-grid index; all weights/biases are
    # block-constant full tiles that stay resident in VMEM.
    in_specs = [pl.BlockSpec((tb, latent), lambda i: (i, 0))]
    for p in flat_params:
        in_specs.append(pl.BlockSpec(p.shape, lambda i: (0, 0)))
    out_specs = pl.BlockSpec((tb, out_pad), lambda i: (i, 0))

    # Scheduler hint for XLA when this call is embedded in a larger jit.
    flops = 2 * padded_batch * (latent * hidden
                                + (n_hidden - 1) * hidden * hidden
                                + hidden * out_pad)
    param_bytes = sum(int(p.size) * 4 for p in flat_params)
    bytes_accessed = 4 * padded_batch * (latent + out_pad) + param_bytes
    cost = pl.CostEstimate(flops=flops,
                           transcendentals=padded_batch * out_pad,
                           bytes_accessed=bytes_accessed)

    out = pl.pallas_call(
        kernel,
        out_shape=jax.ShapeDtypeStruct((padded_batch, out_pad), jnp.float32),
        grid=grid,
        in_specs=in_specs,
        out_specs=out_specs,
        compiler_params=pltpu.CompilerParams(
            dimension_semantics=("parallel",),
            vmem_limit_bytes=64 * 1024 * 1024,
        ),
        cost_estimate=cost,
    )(x, *flat_params)

    # Slice away the batch padding and the lane padding.
    return out[:batch, :out_dims]


def decoder_reference(x, params, img_size):
    """Plain-JAX reference for correctness checking."""
    h = x
    for w, b in params[:-1]:
        h = _leaky_relu(h @ w + b)
    wo, bo = params[-1]
    return jax.nn.sigmoid(h @ wo + bo)


if __name__ == "__main__":
    # Small shapes consistent with the module's forward pass.
    batch = 8
    dimensions_latent = 16
    dimensions_hidden = 32
    output_dimensions = 64
    IMG_SIZE = 28  # != 32 -> the fourth hidden layer is active

    key = jax.random.PRNGKey(0)
    k_x, k_p = jax.random.split(key)

    x = jax.random.normal(k_x, (batch, dimensions_latent), dtype=jnp.float32)
    params = init_decoder_params(k_p, dimensions_latent, dimensions_hidden,
                                 output_dimensions, IMG_SIZE)

    out = decoder_forward(x, params, IMG_SIZE)
    out = jax.block_until_ready(out)

    ref = decoder_reference(x, params, IMG_SIZE)
    assert out.shape == (batch, output_dimensions)
    assert jnp.allclose(out, ref, atol=1e-5, rtol=1e-5), "mismatch vs reference"

    print("KERNEL_OK")
</pallas_src>

<mosaic_0001>
module attributes {stable_mosaic.version = 11 : i64} {
  func.func @_decoder_kernel_4(%arg0: i32, %arg1: memref<8x16xf32, #tpu.memory_space<vmem>>, %arg2: memref<16x32xf32, #tpu.memory_space<vmem>>, %arg3: memref<1x32xf32, #tpu.memory_space<vmem>>, %arg4: memref<32x32xf32, #tpu.memory_space<vmem>>, %arg5: memref<1x32xf32, #tpu.memory_space<vmem>>, %arg6: memref<32x32xf32, #tpu.memory_space<vmem>>, %arg7: memref<1x32xf32, #tpu.memory_space<vmem>>, %arg8: memref<32x32xf32, #tpu.memory_space<vmem>>, %arg9: memref<1x32xf32, #tpu.memory_space<vmem>>, %arg10: memref<32x128xf32, #tpu.memory_space<vmem>>, %arg11: memref<1x128xf32, #tpu.memory_space<vmem>>, %arg12: memref<8x128xf32, #tpu.memory_space<vmem>>) attributes {dimension_semantics = [#tpu.dimension_semantics<parallel>], iteration_bounds = array<i64: 1>, scalar_prefetch = 0 : i64, scratch_operands = 0 : i64, tpu.core_type = #tpu.core_type<tc>, window_params = [{transform_indices = @transform_0, window_bounds = array<i64: 8, 16>}, {pipeline_mode = #tpu.pipeline_mode<synchronous>, transform_indices = @transform_1, window_bounds = array<i64: 16, 32>}, {pipeline_mode = #tpu.pipeline_mode<synchronous>, transform_indices = @transform_2, window_bounds = array<i64: 1, 32>}, {pipeline_mode = #tpu.pipeline_mode<synchronous>, transform_indices = @transform_3, window_bounds = array<i64: 32, 32>}, {pipeline_mode = #tpu.pipeline_mode<synchronous>, transform_indices = @transform_4, window_bounds = array<i64: 1, 32>}, {pipeline_mode = #tpu.pipeline_mode<synchronous>, transform_indices = @transform_5, window_bounds = array<i64: 32, 32>}, {pipeline_mode = #tpu.pipeline_mode<synchronous>, transform_indices = @transform_6, window_bounds = array<i64: 1, 32>}, {pipeline_mode = #tpu.pipeline_mode<synchronous>, transform_indices = @transform_7, window_bounds = array<i64: 32, 32>}, {pipeline_mode = #tpu.pipeline_mode<synchronous>, transform_indices = @transform_8, window_bounds = array<i64: 1, 32>}, {pipeline_mode = #tpu.pipeline_mode<synchronous>, transform_indices = @transform_9, window_bounds = array<i64: 32, 128>}, {pipeline_mode = #tpu.pipeline_mode<synchronous>, transform_indices = @transform_10, window_bounds = array<i64: 1, 128>}, {transform_indices = @transform_11, window_bounds = array<i64: 8, 128>}]} {
    %c0 = arith.constant 0 : index
    %c0_0 = arith.constant 0 : index
    %0 = vector.load %arg1[%c0, %c0_0] : memref<8x16xf32, #tpu.memory_space<vmem>>, vector<8x16xf32>
    %c0_1 = arith.constant 0 : index
    %c0_2 = arith.constant 0 : index
    %1 = vector.load %arg2[%c0_1, %c0_2] : memref<16x32xf32, #tpu.memory_space<vmem>>, vector<16x32xf32>
    %cst = arith.constant dense<0.000000e+00> : vector<8x32xf32>
    %2 = tpu.matmul %0, %1, %cst {dimension_numbers = #tpu.dot_dimension_numbers<[1], [0], [0], [1], [0, 0, 1, 1], [], []>} : vector<8x16xf32>, vector<16x32xf32>, vector<8x32xf32> -> vector<8x32xf32>
    %c0_3 = arith.constant 0 : index
    %c0_4 = arith.constant 0 : index
    %3 = vector.load %arg3[%c0_3, %c0_4] : memref<1x32xf32, #tpu.memory_space<vmem>>, vector<1x32xf32>
    %4 = vector.broadcast %3 : vector<1x32xf32> to vector<8x32xf32>
    %5 = arith.addf %2, %4 : vector<8x32xf32>
    %cst_5 = arith.constant 0.000000e+00 : f32
    %6 = vector.broadcast %cst_5 : f32 to vector<8x32xf32>
    %7 = arith.cmpf ogt, %5, %6 : vector<8x32xf32>
    %cst_6 = arith.constant 2.000000e-01 : f32
    %8 = vector.broadcast %cst_6 : f32 to vector<8x32xf32>
    %9 = arith.mulf %8, %5 : vector<8x32xf32>
    %10 = arith.select %7, %5, %9 : vector<8x32xi1>, vector<8x32xf32>
    %c0_7 = arith.constant 0 : index
    %c0_8 = arith.constant 0 : index
    %11 = vector.load %arg4[%c0_7, %c0_8] : memref<32x32xf32, #tpu.memory_space<vmem>>, vector<32x32xf32>
    %cst_9 = arith.constant dense<0.000000e+00> : vector<8x32xf32>
    %12 = tpu.matmul %10, %11, %cst_9 {dimension_numbers = #tpu.dot_dimension_numbers<[1], [0], [0], [1], [0, 0, 1, 1], [], []>} : vector<8x32xf32>, vector<32x32xf32>, vector<8x32xf32> -> vector<8x32xf32>
    %c0_10 = arith.constant 0 : index
    %c0_11 = arith.constant 0 : index
    %13 = vector.load %arg5[%c0_10, %c0_11] : memref<1x32xf32, #tpu.memory_space<vmem>>, vector<1x32xf32>
    %14 = vector.broadcast %13 : vector<1x32xf32> to vector<8x32xf32>
    %15 = arith.addf %12, %14 : vector<8x32xf32>
    %cst_12 = arith.constant 0.000000e+00 : f32
    %16 = vector.broadcast %cst_12 : f32 to vector<8x32xf32>
    %17 = arith.cmpf ogt, %15, %16 : vector<8x32xf32>
    %cst_13 = arith.constant 2.000000e-01 : f32
    %18 = vector.broadcast %cst_13 : f32 to vector<8x32xf32>
    %19 = arith.mulf %18, %15 : vector<8x32xf32>
    %20 = arith.select %17, %15, %19 : vector<8x32xi1>, vector<8x32xf32>
    %c0_14 = arith.constant 0 : index
    %c0_15 = arith.constant 0 : index
    %21 = vector.load %arg6[%c0_14, %c0_15] : memref<32x32xf32, #tpu.memory_space<vmem>>, vector<32x32xf32>
    %cst_16 = arith.constant dense<0.000000e+00> : vector<8x32xf32>
    %22 = tpu.matmul %20, %21, %cst_16 {dimension_numbers = #tpu.dot_dimension_numbers<[1], [0], [0], [1], [0, 0, 1, 1], [], []>} : vector<8x32xf32>, vector<32x32xf32>, vector<8x32xf32> -> vector<8x32xf32>
    %c0_17 = arith.constant 0 : index
    %c0_18 = arith.constant 0 : index
    %23 = vector.load %arg7[%c0_17, %c0_18] : memref<1x32xf32, #tpu.memory_space<vmem>>, vector<1x32xf32>
    %24 = vector.broadcast %23 : vector<1x32xf32> to vector<8x32xf32>
    %25 = arith.addf %22, %24 : vector<8x32xf32>
    %cst_19 = arith.constant 0.000000e+00 : f32
    %26 = vector.broadcast %cst_19 : f32 to vector<8x32xf32>
    %27 = arith.cmpf ogt, %25, %26 : vector<8x32xf32>
    %cst_20 = arith.constant 2.000000e-01 : f32
    %28 = vector.broadcast %cst_20 : f32 to vector<8x32xf32>
    %29 = arith.mulf %28, %25 : vector<8x32xf32>
    %30 = arith.select %27, %25, %29 : vector<8x32xi1>, vector<8x32xf32>
    %c0_21 = arith.constant 0 : index
    %c0_22 = arith.constant 0 : index
    %31 = vector.load %arg8[%c0_21, %c0_22] : memref<32x32xf32, #tpu.memory_space<vmem>>, vector<32x32xf32>
    %cst_23 = arith.constant dense<0.000000e+00> : vector<8x32xf32>
    %32 = tpu.matmul %30, %31, %cst_23 {dimension_numbers = #tpu.dot_dimension_numbers<[1], [0], [0], [1], [0, 0, 1, 1], [], []>} : vector<8x32xf32>, vector<32x32xf32>, vector<8x32xf32> -> vector<8x32xf32>
    %c0_24 = arith.constant 0 : index
    %c0_25 = arith.constant 0 : index
    %33 = vector.load %arg9[%c0_24, %c0_25] : memref<1x32xf32, #tpu.memory_space<vmem>>, vector<1x32xf32>
    %34 = vector.broadcast %33 : vector<1x32xf32> to vector<8x32xf32>
    %35 = arith.addf %32, %34 : vector<8x32xf32>
    %cst_26 = arith.constant 0.000000e+00 : f32
    %36 = vector.broadcast %cst_26 : f32 to vector<8x32xf32>
    %37 = arith.cmpf ogt, %35, %36 : vector<8x32xf32>
    %cst_27 = arith.constant 2.000000e-01 : f32
    %38 = vector.broadcast %cst_27 : f32 to vector<8x32xf32>
    %39 = arith.mulf %38, %35 : vector<8x32xf32>
    %40 = arith.select %37, %35, %39 : vector<8x32xi1>, vector<8x32xf32>
    %c0_28 = arith.constant 0 : index
    %c0_29 = arith.constant 0 : index
    %41 = vector.load %arg10[%c0_28, %c0_29] : memref<32x128xf32, #tpu.memory_space<vmem>>, vector<32x128xf32>
    %cst_30 = arith.constant dense<0.000000e+00> : vector<8x128xf32>
    %42 = tpu.matmul %40, %41, %cst_30 {dimension_numbers = #tpu.dot_dimension_numbers<[1], [0], [0], [1], [0, 0, 1, 1], [], []>} : vector<8x32xf32>, vector<32x128xf32>, vector<8x128xf32> -> vector<8x128xf32>
    %c0_31 = arith.constant 0 : index
    %c0_32 = arith.constant 0 : index
    %43 = vector.load %arg11[%c0_31, %c0_32] : memref<1x128xf32, #tpu.memory_space<vmem>>, vector<1x128xf32>
    %44 = vector.broadcast %43 : vector<1x128xf32> to vector<8x128xf32>
    %45 = arith.addf %42, %44 : vector<8x128xf32>
    %46 = arith.negf %45 : vector<8x128xf32>
    %47 = math.exp %46 : vector<8x128xf32>
    %cst_33 = arith.constant 1.000000e+00 : f32
    %48 = vector.broadcast %cst_33 : f32 to vector<8x128xf32>
    %49 = arith.addf %48, %47 : vector<8x128xf32>
    %50 = arith.divf %48, %49 : vector<8x128xf32>
    %c0_34 = arith.constant 0 : index
    %c0_35 = arith.constant 0 : index
    %51 = vector.load %arg12[%c0_34, %c0_35] : memref<8x128xf32, #tpu.memory_space<vmem>>, vector<8x128xf32>
    tpu.vector_store %arg12[%c0_34, %c0_35], %50 {strides = array<i32>} : memref<8x128xf32, #tpu.memory_space<vmem>>, vector<8x128xf32>,
    return
  }
  func.func @transform_0(%arg0: i32) -> (i32, i32) {
    %c0_i32 = arith.constant 0 : i32
    %c0_i32_0 = arith.constant 0 : i32
    return %arg0, %c0_i32 : i32, i32
  }
  func.func @transform_1(%arg0: i32) -> (i32, i32) {
    %c0_i32 = arith.constant 0 : i32
    %c0_i32_0 = arith.constant 0 : i32
    %c0_i32_1 = arith.constant 0 : i32
    return %c0_i32, %c0_i32_0 : i32, i32
  }
  func.func @transform_2(%arg0: i32) -> (i32, i32) {
    %c0_i32 = arith.constant 0 : i32
    %c0_i32_0 = arith.constant 0 : i32
    %c0_i32_1 = arith.constant 0 : i32
    return %c0_i32, %c0_i32_0 : i32, i32
  }
  func.func @transform_3(%arg0: i32) -> (i32, i32) {
    %c0_i32 = arith.constant 0 : i32
    %c0_i32_0 = arith.constant 0 : i32
    %c0_i32_1 = arith.constant 0 : i32
    return %c0_i32, %c0_i32_0 : i32, i32
  }
  func.func @transform_4(%arg0: i32) -> (i32, i32) {
    %c0_i32 = arith.constant 0 : i32
    %c0_i32_0 = arith.constant 0 : i32
    %c0_i32_1 = arith.constant 0 : i32
    return %c0_i32, %c0_i32_0 : i32, i32
  }
  func.func @transform_5(%arg0: i32) -> (i32, i32) {
    %c0_i32 = arith.constant 0 : i32
    %c0_i32_0 = arith.constant 0 : i32
    %c0_i32_1 = arith.constant 0 : i32
    return %c0_i32, %c0_i32_0 : i32, i32
  }
  func.func @transform_6(%arg0: i32) -> (i32, i32) {
    %c0_i32 = arith.constant 0 : i32
    %c0_i32_0 = arith.constant 0 : i32
    %c0_i32_1 = arith.constant 0 : i32
    return %c0_i32, %c0_i32_0 : i32, i32
  }
  func.func @transform_7(%arg0: i32) -> (i32, i32) {
    %c0_i32 = arith.constant 0 : i32
    %c0_i32_0 = arith.constant 0 : i32
    %c0_i32_1 = arith.constant 0 : i32
    return %c0_i32, %c0_i32_0 : i32, i32
  }
  func.func @transform_8(%arg0: i32) -> (i32, i32) {
    %c0_i32 = arith.constant 0 : i32
    %c0_i32_0 = arith.constant 0 : i32
    %c0_i32_1 = arith.constant 0 : i32
    return %c0_i32, %c0_i32_0 : i32, i32
  }
  func.func @transform_9(%arg0: i32) -> (i32, i32) {
    %c0_i32 = arith.constant 0 : i32
    %c0_i32_0 = arith.constant 0 : i32
    %c0_i32_1 = arith.constant 0 : i32
    return %c0_i32, %c0_i32_0 : i32, i32
  }
  func.func @transform_10(%arg0: i32) -> (i32, i32) {
    %c0_i32 = arith.constant 0 : i32
    %c0_i32_0 = arith.constant 0 : i32
    %c0_i32_1 = arith.constant 0 : i32
    return %c0_i32, %c0_i32_0 : i32, i32
  }
  func.func @transform_11(%arg0: i32) -> (i32, i32) {
    %c0_i32 = arith.constant 0 : i32
    %c0_i32_0 = arith.constant 0 : i32
    return %arg0, %c0_i32 : i32, i32
  }
}

</mosaic_0001>

<llo_original>
// kernel: decoder_forward.1
$region0: #{decoder_forward.1}
  #allocation0 [shape = 'u32[]', space=smem, size = 0x4, offset = 0x4, fixed_abs, tag = 'smem constant byte address 0x4 - core index']
  #allocation1 [shape = 'u32[144,128]{1,0:T(1,128)}', space=vmem, size = 0x12000, scoped, tag = 'internal scratch']
  %s0 = inlined_call_operand.hbm [shape: f32[8,16], index: 0, kind: input, shape index: {}]
  %s1 = inlined_call_operand.hbm [shape: f32[16,32], index: 1, kind: input, shape index: {}]
  %s2 = inlined_call_operand.hbm [shape: f32[1,32], index: 2, kind: input, shape index: {}]
  %s3 = inlined_call_operand.hbm [shape: f32[32,32], index: 3, kind: input, shape index: {}]
  %s4 = inlined_call_operand.hbm [shape: f32[1,32], index: 4, kind: input, shape index: {}]
  %s5 = inlined_call_operand.hbm [shape: f32[32,32], index: 5, kind: input, shape index: {}]
  %s6 = inlined_call_operand.hbm [shape: f32[1,32], index: 6, kind: input, shape index: {}]
  %s7 = inlined_call_operand.hbm [shape: f32[32,32], index: 7, kind: input, shape index: {}]
  %s8 = inlined_call_operand.hbm [shape: f32[1,32], index: 8, kind: input, shape index: {}]
  %s9 = inlined_call_operand.hbm [shape: f32[32,128], index: 9, kind: input, shape index: {}]
  %s10 = inlined_call_operand.hbm [shape: f32[1,128], index: 10, kind: input, shape index: {}]
  %s11 = inlined_call_operand.hbm [shape: f32[8,128], index: 11, kind: output, shape index: {}]
  %s12 = sld [smem:[#allocation0]]
  $region98: #{decoder_forward.1} parent=0
    _
  %s14 = ssub.s32 1, %s12
  %s15 = scalar_select 0, %s14, %s12
  $region1: #{decoder_forward.1} parent=0
    #allocation2 [shape = 'u8[4096]{0}', space=vmem, size = 0x1000, scoped, tag = 'input window, operand 0, single buffered']
    #allocation3 [shape = 's32[1]{0}', space=sflag, size = 0x4, scoped, tag = 'scoped memory for decoder_forward.1']
    #allocation4 [shape = 's32[1]{0}', space=sflag, size = 0x4, scoped, tag = 'scoped memory for decoder_forward.1']
    #allocation5 [shape = 'u8[8192]{0}', space=vmem, size = 0x2000, scoped, tag = 'input window, operand 1, single buffered']
    #allocation6 [shape = 's32[1]{0}', space=sflag, size = 0x4, scoped, tag = 'scoped memory for decoder_forward.1']
    #allocation7 [shape = 'u8[512]{0}', space=vmem, size = 0x400, scoped, tag = 'input window, operand 2, single buffered']
    #allocation8 [shape = 'u8[16384]{0}', space=vmem, size = 0x4000, scoped, tag = 'input window, operand 3, single buffered']
    #allocation9 [shape = 's32[1]{0}', space=sflag, size = 0x4, scoped, tag = 'scoped memory for decoder_forward.1']
    #allocation10 [shape = 'u8[512]{0}', space=vmem, size = 0x400, scoped, tag = 'input window, operand 4, single buffered']
    #allocation11 [shape = 'u8[16384]{0}', space=vmem, size = 0x4000, scoped, tag = 'input window, operand 5, single buffered']
    #allocation12 [shape = 's32[1]{0}', space=sflag, size = 0x4, scoped, tag = 'scoped memory for decoder_forward.1']
    #allocation13 [shape = 'u8[512]{0}', space=vmem, size = 0x400, scoped, tag = 'input window, operand 6, single buffered']
    #allocation14 [shape = 'u8[16384]{0}', space=vmem, size = 0x4000, scoped, tag = 'input window, operand 7, single buffered']
    #allocation15 [shape = 's32[1]{0}', space=sflag, size = 0x4, scoped, tag = 'scoped memory for decoder_forward.1']
    #allocation16 [shape = 'u8[512]{0}', space=vmem, size = 0x400, scoped, tag = 'input window, operand 8, single buffered']
    #allocation17 [shape = 'u8[16384]{0}', space=vmem, size = 0x4000, scoped, tag = 'input window, operand 9, single buffered']
    #allocation18 [shape = 's32[1]{0}', space=sflag, size = 0x4, scoped, tag = 'scoped memory for decoder_forward.1']
    #allocation19 [shape = 'u8[512]{0}', space=vmem, size = 0x400, scoped, tag = 'input window, operand 10, single buffered']
    #allocation20 [shape = 'u8[4096]{0}', space=vmem, size = 0x1000, scoped, tag = 'output window, operand 0, single buffered']
    %16 = vsyncpa [#allocation3], 0
    %17 = vsyncpa [#allocation6], 0
    %18 = vsyncpa [#allocation9], 0
    %19 = vsyncpa [#allocation12], 0
    %20 = vsyncpa [#allocation15], 0
    %21 = vsyncpa [#allocation18], 0
    %22 = vsyncpa [#allocation4], 0
    // Predicated region
    $region2: #{decoder_forward.1} parent=1 // pred_check
      _
    $region3: #{decoder_forward.1} parent=1 // pred_check_branch
      %24 = sbr.rel (0) target = $region5
    $region4: #{decoder_forward.1} parent=1 // pred_region
      %s26 = ssub.s32 128, 128
      %27 = vsyncadd [#allocation3], %s26
      %s29 = sshll.u32 [#allocation2], 4
      %s30 = int_to_ptr.vmem [resolvable:$true] %s29
      %32 = dma.hbm_to_vmem [thread:$0]  %s0, 128, %s30, [#allocation3]
    $region5: #{decoder_forward.1} parent=1 // pred_fallthru
      _
    // Predicated region
    $region6: #{decoder_forward.1} parent=1 // pred_check
      _
    $region7: #{decoder_forward.1} parent=1 // pred_check_branch
      %34 = sbr.rel (0) target = $region9
    $region8: #{decoder_forward.1} parent=1 // pred_region
      %s36 = ssub.s32 256, 256
      %37 = vsyncadd [#allocation6], %s36
      %s38 = sshll.u32 [#allocation5], 4
      %s39 = int_to_ptr.vmem [resolvable:$true] %s38
      %44 = dma.hbm_to_vmem [thread:$0]  %s1, 256, %s39, [#allocation6], 128, 128, 8
    $region9: #{decoder_forward.1} parent=1 // pred_fallthru
      _
    // Predicated region
    $region10: #{decoder_forward.1} parent=1 // pred_check
      _
    $region11: #{decoder_forward.1} parent=1 // pred_check_branch
      %46 = sbr.rel (0) target = $region13
    $region12: #{decoder_forward.1} parent=1 // pred_region
      %s48 = ssub.s32 16, 16
      %49 = vsyncadd [#allocation6], %s48
      %s51 = sshll.u32 [#allocation7], 4
      %s52 = int_to_ptr.vmem [resolvable:$true] %s51
      %54 = dma.hbm_to_vmem [thread:$0]  %s2, 16, %s52, [#allocation6]
    $region13: #{decoder_forward.1} parent=1 // pred_fallthru
      _
    // Predicated region
    $region14: #{decoder_forward.1} parent=1 // pred_check
      _
    $region15: #{decoder_forward.1} parent=1 // pred_check_branch
      %56 = sbr.rel (0) target = $region17
    $region16: #{decoder_forward.1} parent=1 // pred_region
      %s58 = ssub.s32 512, 512
      %59 = vsyncadd [#allocation9], %s58
      %s60 = sshll.u32 [#allocation8], 4
      %s61 = int_to_ptr.vmem [resolvable:$true] %s60
      %66 = dma.hbm_to_vmem [thread:$0]  %s3, 512, %s61, [#allocation9], 128, 128, 8
    $region17: #{decoder_forward.1} parent=1 // pred_fallthru
      _
    // Predicated region
    $region18: #{decoder_forward.1} parent=1 // pred_check
      _
    $region19: #{decoder_forward.1} parent=1 // pred_check_branch
      %68 = sbr.rel (0) target = $region21
    $region20: #{decoder_forward.1} parent=1 // pred_region
      %s70 = ssub.s32 16, 16
      %71 = vsyncadd [#allocation9], %s70
      %s73 = sshll.u32 [#allocation10], 4
      %s74 = int_to_ptr.vmem [resolvable:$true] %s73
      %76 = dma.hbm_to_vmem [thread:$0]  %s4, 16, %s74, [#allocation9]
    $region21: #{decoder_forward.1} parent=1 // pred_fallthru
      _
    // Predicated region
    $region22: #{decoder_forward.1} parent=1 // pred_check
      _
    $region23: #{decoder_forward.1} parent=1 // pred_check_branch
      %78 = sbr.rel (0) target = $region25
    $region24: #{decoder_forward.1} parent=1 // pred_region
      %s80 = ssub.s32 512, 512
      %81 = vsyncadd [#allocation12], %s80
      %s82 = sshll.u32 [#allocation11], 4
      %s83 = int_to_ptr.vmem [resolvable:$true] %s82
      %88 = dma.hbm_to_vmem [thread:$0]  %s5, 512, %s83, [#allocation12], 128, 128, 8
    $region25: #{decoder_forward.1} parent=1 // pred_fallthru
      _
    // Predicated region
    $region26: #{decoder_forward.1} parent=1 // pred_check
      _
    $region27: #{decoder_forward.1} parent=1 // pred_check_branch
      %90 = sbr.rel (0) target = $region29
    $region28: #{decoder_forward.1} parent=1 // pred_region
      %s92 = ssub.s32 16, 16
      %93 = vsyncadd [#allocation12], %s92
      %s95 = sshll.u32 [#allocation13], 4
      %s96 = int_to_ptr.vmem [resolvable:$true] %s95
      %98 = dma.hbm_to_vmem [thread:$0]  %s6, 16, %s96, [#allocation12]
    $region29: #{decoder_forward.1} parent=1 // pred_fallthru
      _
    // Predicated region
    $region30: #{decoder_forward.1} parent=1 // pred_check
      _
    $region31: #{decoder_forward.1} parent=1 // pred_check_branch
      %100 = sbr.rel (0) target = $region33
    $region32: #{decoder_forward.1} parent=1 // pred_region
      %s102 = ssub.s32 512, 512
      %103 = vsyncadd [#allocation15], %s102
      %s104 = sshll.u32 [#allocation14], 4
      %s105 = int_to_ptr.vmem [resolvable:$true] %s104
      %110 = dma.hbm_to_vmem [thread:$0]  %s7, 512, %s105, [#allocation15], 128, 128, 8
    $region33: #{decoder_forward.1} parent=1 // pred_fallthru
      _
    // Predicated region
    $region34: #{decoder_forward.1} parent=1 // pred_check
      _
    $region35: #{decoder_forward.1} parent=1 // pred_check_branch
      %112 = sbr.rel (0) target = $region37
    $region36: #{decoder_forward.1} parent=1 // pred_region
      %s114 = ssub.s32 16, 16
      %115 = vsyncadd [#allocation15], %s114
      %s117 = sshll.u32 [#allocation16], 4
      %s118 = int_to_ptr.vmem [resolvable:$true] %s117
      %120 = dma.hbm_to_vmem [thread:$0]  %s8, 16, %s118, [#allocation15]
    $region37: #{decoder_forward.1} parent=1 // pred_fallthru
      _
    // Predicated region
    $region38: #{decoder_forward.1} parent=1 // pred_check
      _
    $region39: #{decoder_forward.1} parent=1 // pred_check_branch
      %122 = sbr.rel (0) target = $region41
    $region40: #{decoder_forward.1} parent=1 // pred_region
      %s124 = ssub.s32 512, 512
      %125 = vsyncadd [#allocation18], %s124
      %s126 = sshll.u32 [#allocation17], 4
      %s127 = int_to_ptr.vmem [resolvable:$true] %s126
      %132 = dma.hbm_to_vmem [thread:$0]  %s9, 512, %s127, [#allocation18], 128, 128, 8
    $region41: #{decoder_forward.1} parent=1 // pred_fallthru
      _
    // Predicated region
    $region42: #{decoder_forward.1} parent=1 // pred_check
      _
    $region43: #{decoder_forward.1} parent=1 // pred_check_branch
      %134 = sbr.rel (0) target = $region45
    $region44: #{decoder_forward.1} parent=1 // pred_region
      %s136 = ssub.s32 16, 16
      %137 = vsyncadd [#allocation18], %s136
      %s139 = sshll.u32 [#allocation19], 4
      %s140 = int_to_ptr.vmem [resolvable:$true] %s139
      %142 = dma.hbm_to_vmem [thread:$0]  %s10, 16, %s140, [#allocation18]
    $region45: #{decoder_forward.1} parent=1 // pred_fallthru
      _
    // Predicated region
    $region46: #{decoder_forward.1} parent=1 // pred_check
      _
    $region47: #{decoder_forward.1} parent=1 // pred_check_branch
      %144 = sbr.rel (0) target = $region49
    $region48: #{decoder_forward.1} parent=1 // pred_region
      %145 = dma.done [#allocation3], 128
    $region49: #{decoder_forward.1} parent=1 // pred_fallthru
      _
    // Predicated region
    $region50: #{decoder_forward.1} parent=1 // pred_check
      _
    $region51: #{decoder_forward.1} parent=1 // pred_check_branch
      %147 = sbr.rel (0) target = $region53
    $region52: #{decoder_forward.1} parent=1 // pred_region
      %148 = dma.done [#allocation6], 256
    $region53: #{decoder_forward.1} parent=1 // pred_fallthru
      _
    // Predicated region
    $region54: #{decoder_forward.1} parent=1 // pred_check
      _
    $region55: #{decoder_forward.1} parent=1 // pred_check_branch
      %150 = sbr.rel (0) target = $region57
    $region56: #{decoder_forward.1} parent=1 // pred_region
      %151 = dma.done [#allocation6], 16
    $region57: #{decoder_forward.1} parent=1 // pred_fallthru
      _
    // Predicated region
    $region58: #{decoder_forward.1} parent=1 // pred_check
      _
    $region59: #{decoder_forward.1} parent=1 // pred_check_branch
      %153 = sbr.rel (0) target = $region61
    $region60: #{decoder_forward.1} parent=1 // pred_region
      %154 = dma.done [#allocation9], 512
    $region61: #{decoder_forward.1} parent=1 // pred_fallthru
      _
    // Predicated region
    $region62: #{decoder_forward.1} parent=1 // pred_check
      _
    $region63: #{decoder_forward.1} parent=1 // pred_check_branch
      %156 = sbr.rel (0) target = $region65
    $region64: #{decoder_forward.1} parent=1 // pred_region
      %157 = dma.done [#allocation9], 16
    $region65: #{decoder_forward.1} parent=1 // pred_fallthru
      _
    // Predicated region
    $region66: #{decoder_forward.1} parent=1 // pred_check
      _
    $region67: #{decoder_forward.1} parent=1 // pred_check_branch
      %159 = sbr.rel (0) target = $region69
    $region68: #{decoder_forward.1} parent=1 // pred_region
      %160 = dma.done [#allocation12], 512
    $region69: #{decoder_forward.1} parent=1 // pred_fallthru
      _
    // Predicated region
    $region70: #{decoder_forward.1} parent=1 // pred_check
      _
    $region71: #{decoder_forward.1} parent=1 // pred_check_branch
      %162 = sbr.rel (0) target = $region73
    $region72: #{decoder_forward.1} parent=1 // pred_region
      %163 = dma.done [#allocation12], 16
    $region73: #{decoder_forward.1} parent=1 // pred_fallthru
      _
    // Predicated region
    $region74: #{decoder_forward.1} parent=1 // pred_check
      _
    $region75: #{decoder_forward.1} parent=1 // pred_check_branch
      %165 = sbr.rel (0) target = $region77
    $region76: #{decoder_forward.1} parent=1 // pred_region
      %166 = dma.done [#allocation15], 512
    $region77: #{decoder_forward.1} parent=1 // pred_fallthru
      _
    // Predicated region
    $region78: #{decoder_forward.1} parent=1 // pred_check
      _
    $region79: #{decoder_forward.1} parent=1 // pred_check_branch
      %168 = sbr.rel (0) target = $region81
    $region80: #{decoder_forward.1} parent=1 // pred_region
      %169 = dma.done [#allocation15], 16
    $region81: #{decoder_forward.1} parent=1 // pred_fallthru
      _
    // Predicated region
    $region82: #{decoder_forward.1} parent=1 // pred_check
      _
    $region83: #{decoder_forward.1} parent=1 // pred_check_branch
      %171 = sbr.rel (0) target = $region85
    $region84: #{decoder_forward.1} parent=1 // pred_region
      %172 = dma.done [#allocation18], 512
    $region85: #{decoder_forward.1} parent=1 // pred_fallthru
      _
    // Predicated region
    $region86: #{decoder_forward.1} parent=1 // pred_check
      _
    $region87: #{decoder_forward.1} parent=1 // pred_check_branch
      %174 = sbr.rel (0) target = $region89
    $region88: #{decoder_forward.1} parent=1 // pred_region
      %175 = dma.done [#allocation18], 16
    $region89: #{decoder_forward.1} parent=1 // pred_fallthru
      _
    %v176 = vld [vmem:[#allocation2] sm:$0xff]
    %v177 = vld [vmem:[#allocation5] sm:$0xff]
    %v178 = vld [vmem:[#allocation5 + $0x8] sm:$0xff]
    %v179 = vld [vmem:[#allocation7] sm:$0x1]
    %v181 = vlaneseq
    %v182 = vshrl.u32 %v181, 7
    %v183 = vsub.s32 0, %v182
    %v184 = vrot.slane %v179, %v183
    %vm186 = vcmask 130048
    %v188 = vsel %vm186, %v176, 0
    %190 = vmatprep.subr.mxu0 0.0
    %191 = vmatpush1.msra.mxu0 %v177
    %192 = vmatprep.subr.mxu0 0.0
    %193 = vmatpush1.msra.mxu0 %v178
    %194 = vmatprep.subr.mxu0 0.0
    %195 = vmatpush1.msra.mxu0 0.0
    %196 = vmatprep.subr.mxu0 0.0
    %197 = vmatpush1.msra.mxu0 0.0
    %198 = vmatprep.subr.mxu0 0.0
    %199 = vmatpush1.msra.mxu0 0.0
    %200 = vmatprep.subr.mxu0 0.0
    %201 = vmatpush1.msra.mxu0 0.0
    %202 = vmatprep.subr.mxu0 0.0
    %203 = vmatpush1.msra.mxu0 0.0
    %204 = vmatprep.subr.mxu0 0.0
    %205 = vmatpush1.msra.mxu0 0.0
    %206 = vmatprep.subr.mxu0 0.0
    %207 = vmatpush1.msra.mxu0 0.0
    %208 = vmatprep.subr.mxu0 0.0
    %209 = vmatpush1.msra.mxu0 0.0
    %210 = vmatprep.subr.mxu0 0.0
    %211 = vmatpush1.msra.mxu0 0.0
    %212 = vmatprep.subr.mxu0 0.0
    %213 = vmatpush1.msra.mxu0 0.0
    %214 = vmatprep.subr.mxu0 0.0
    %215 = vmatpush1.msra.mxu0 0.0
    %216 = vmatprep.subr.mxu0 0.0
    %217 = vmatpush1.msra.mxu0 0.0
    %218 = vmatprep.subr.mxu0 0.0
    %219 = vmatpush1.msra.mxu0 0.0
    %220 = vmatprep.subr.mxu0 0.0
    %221 = vmatpush1.msra.mxu0 0.0
    %222 = vmatprep.subr.mxu0 0.0
    %223 = vmatpush1.msra.mxu0 0.0
    %224 = vmatprep.subr.mxu0 0.0
    %225 = vmatpush1.msra.mxu0 0.0
    %226 = vmatprep.subr.mxu0 0.0
    %227 = vmatpush1.msra.mxu0 0.0
    %228 = vmatprep.subr.mxu0 0.0
    %229 = vmatpush1.msra.mxu0 0.0
    %230 = vmatprep.subr.mxu0 0.0
    %231 = vmatpush1.msra.mxu0 0.0
    %232 = vmatprep.subr.mxu0 0.0
    %233 = vmatpush1.msra.mxu0 0.0
    %234 = vmatprep.subr.mxu0 0.0
    %235 = vmatpush1.msra.mxu0 0.0
    %236 = vmatprep.subr.mxu0 0.0
    %237 = vmatpush1.msra.mxu0 0.0
    %238 = vmatprep.subr.mxu0 0.0
    %239 = vmatpush1.msra.mxu0 0.0
    %240 = vmatprep.subr.mxu0 0.0
    %241 = vmatpush1.msra.mxu0 0.0
    %242 = vmatprep.subr.mxu0 0.0
    %243 = vmatpush1.msra.mxu0 0.0
    %244 = vmatprep.subr.mxu0 0.0
    %245 = vmatpush1.msra.mxu0 0.0
    %246 = vmatprep.subr.mxu0 0.0
    %247 = vmatpush1.msra.mxu0 0.0
    %248 = vmatprep.subr.mxu0 0.0
    %249 = vmatpush1.msra.mxu0 0.0
    %250 = vmatprep.subr.mxu0 0.0
    %251 = vmatpush1.msra.mxu0 0.0
    %252 = vmatprep.subr.mxu0 0.0
    %253 = vmatpush1.msra.mxu0 0.0
    %254 = vmatprep.mubr.f32.mxu0 0.0
    %255 = vmatmul.mubr.f32.gmra.mrb[0].mxu0 %v188
    %v256 = vpop.f32.mrb[0].mxu0
    %v257 = vadd.f32 %v184, %v256
    %v258 = vpop.f32.mrb[0].mxu0
    %259 = vdwg.mxu0
    %vm260 = vcmp.gt.f32.partialorder %v257, 0.0
    %v261 = vmul.f32 %v257, 0.2
    %v262 = vsel %vm260, %v257, %v261
    %v263 = vld [vmem:[#allocation8] sm:$0xff]
    %v264 = vld [vmem:[#allocation8 + $0x8] sm:$0xff]
    %v265 = vld [vmem:[#allocation8 + $0x10] sm:$0xff]
    %v266 = vld [vmem:[#allocation8 + $0x18] sm:$0xff]
    %v267 = vld [vmem:[#allocation10] sm:$0x1]
    %v269 = vlaneseq
    %v270 = vshrl.u32 %v269, 7
    %v271 = vsub.s32 0, %v270
    %v272 = vrot.slane %v267, %v271
    %vm274 = vcmask 261120
    %v276 = vsel %vm274, %v262, 0
    %278 = vmatprep.subr.mxu0 0.0
    %279 = vmatpush1.msra.mxu0 %v263
    %280 = vmatprep.subr.mxu0 0.0
    %281 = vmatpush1.msra.mxu0 %v264
    %282 = vmatprep.subr.mxu0 0.0
    %283 = vmatpush1.msra.mxu0 %v265
    %284 = vmatprep.subr.mxu0 0.0
    %285 = vmatpush1.msra.mxu0 %v266
    %286 = vmatprep.subr.mxu0 0.0
    %287 = vmatpush1.msra.mxu0 0.0
    %288 = vmatprep.subr.mxu0 0.0
    %289 = vmatpush1.msra.mxu0 0.0
    %290 = vmatprep.subr.mxu0 0.0
    %291 = vmatpush1.msra.mxu0 0.0
    %292 = vmatprep.subr.mxu0 0.0
    %293 = vmatpush1.msra.mxu0 0.0
    %294 = vmatprep.subr.mxu0 0.0
    %295 = vmatpush1.msra.mxu0 0.0
    %296 = vmatprep.subr.mxu0 0.0
    %297 = vmatpush1.msra.mxu0 0.0
    %298 = vmatprep.subr.mxu0 0.0
    %299 = vmatpush1.msra.mxu0 0.0
    %300 = vmatprep.subr.mxu0 0.0
    %301 = vmatpush1.msra.mxu0 0.0
    %302 = vmatprep.subr.mxu0 0.0
    %303 = vmatpush1.msra.mxu0 0.0
    %304 = vmatprep.subr.mxu0 0.0
    %305 = vmatpush1.msra.mxu0 0.0
    %306 = vmatprep.subr.mxu0 0.0
    %307 = vmatpush1.msra.mxu0 0.0
    %308 = vmatprep.subr.mxu0 0.0
    %309 = vmatpush1.msra.mxu0 0.0
    %310 = vmatprep.subr.mxu0 0.0
    %311 = vmatpush1.msra.mxu0 0.0
    %312 = vmatprep.subr.mxu0 0.0
    %313 = vmatpush1.msra.mxu0 0.0
    %314 = vmatprep.subr.mxu0 0.0
    %315 = vmatpush1.msra.mxu0 0.0
    %316 = vmatprep.subr.mxu0 0.0
    %317 = vmatpush1.msra.mxu0 0.0
    %318 = vmatprep.subr.mxu0 0.0
    %319 = vmatpush1.msra.mxu0 0.0
    %320 = vmatprep.subr.mxu0 0.0
    %321 = vmatpush1.msra.mxu0 0.0
    %322 = vmatprep.subr.mxu0 0.0
    %323 = vmatpush1.msra.mxu0 0.0
    %324 = vmatprep.subr.mxu0 0.0
    %325 = vmatpush1.msra.mxu0 0.0
    %326 = vmatprep.subr.mxu0 0.0
    %327 = vmatpush1.msra.mxu0 0.0
    %328 = vmatprep.subr.mxu0 0.0
    %329 = vmatpush1.msra.mxu0 0.0
    %330 = vmatprep.subr.mxu0 0.0
    %331 = vmatpush1.msra.mxu0 0.0
    %332 = vmatprep.subr.mxu0 0.0
    %333 = vmatpush1.msra.mxu0 0.0
    %334 = vmatprep.subr.mxu0 0.0
    %335 = vmatpush1.msra.mxu0 0.0
    %336 = vmatprep.subr.mxu0 0.0
    %337 = vmatpush1.msra.mxu0 0.0
    %338 = vmatprep.subr.mxu0 0.0
    %339 = vmatpush1.msra.mxu0 0.0
    %340 = vmatprep.subr.mxu0 0.0
    %341 = vmatpush1.msra.mxu0 0.0
    %342 = vmatprep.mubr.f32.mxu0 0.0
    %343 = vmatmul.mubr.f32.gmra.mrb[0].mxu0 %v276
    %v344 = vpop.f32.mrb[0].mxu0
    %v345 = vadd.f32 %v272, %v344
    %v346 = vpop.f32.mrb[0].mxu0
    %347 = vdwg.mxu0
    %vm348 = vcmp.gt.f32.partialorder %v345, 0.0
    %v349 = vmul.f32 %v345, 0.2
    %v350 = vsel %vm348, %v345, %v349
    %v351 = vld [vmem:[#allocation11] sm:$0xff]
    %v352 = vld [vmem:[#allocation11 + $0x8] sm:$0xff]
    %v353 = vld [vmem:[#allocation11 + $0x10] sm:$0xff]
    %v354 = vld [vmem:[#allocation11 + $0x18] sm:$0xff]
    %v355 = vld [vmem:[#allocation13] sm:$0x1]
    %v357 = vlaneseq
    %v358 = vshrl.u32 %v357, 7
    %v359 = vsub.s32 0, %v358
    %v360 = vrot.slane %v355, %v359
    %v363 = vsel %vm274, %v350, 0
    %365 = vmatprep.subr.mxu0 0.0
    %366 = vmatpush1.msra.mxu0 %v351
    %367 = vmatprep.subr.mxu0 0.0
    %368 = vmatpush1.msra.mxu0 %v352
    %369 = vmatprep.subr.mxu0 0.0
    %370 = vmatpush1.msra.mxu0 %v353
    %371 = vmatprep.subr.mxu0 0.0
    %372 = vmatpush1.msra.mxu0 %v354
    %373 = vmatprep.subr.mxu0 0.0
    %374 = vmatpush1.msra.mxu0 0.0
    %375 = vmatprep.subr.mxu0 0.0
    %376 = vmatpush1.msra.mxu0 0.0
    %377 = vmatprep.subr.mxu0 0.0
    %378 = vmatpush1.msra.mxu0 0.0
    %379 = vmatprep.subr.mxu0 0.0
    %380 = vmatpush1.msra.mxu0 0.0
    %381 = vmatprep.subr.mxu0 0.0
    %382 = vmatpush1.msra.mxu0 0.0
    %383 = vmatprep.subr.mxu0 0.0
    %384 = vmatpush1.msra.mxu0 0.0
    %385 = vmatprep.subr.mxu0 0.0
    %386 = vmatpush1.msra.mxu0 0.0
    %387 = vmatprep.subr.mxu0 0.0
    %388 = vmatpush1.msra.mxu0 0.0
    %389 = vmatprep.subr.mxu0 0.0
    %390 = vmatpush1.msra.mxu0 0.0
    %391 = vmatprep.subr.mxu0 0.0
    %392 = vmatpush1.msra.mxu0 0.0
    %393 = vmatprep.subr.mxu0 0.0
    %394 = vmatpush1.msra.mxu0 0.0
    %395 = vmatprep.subr.mxu0 0.0
    %396 = vmatpush1.msra.mxu0 0.0
    %397 = vmatprep.subr.mxu0 0.0
    %398 = vmatpush1.msra.mxu0 0.0
    %399 = vmatprep.subr.mxu0 0.0
    %400 = vmatpush1.msra.mxu0 0.0
    %401 = vmatprep.subr.mxu0 0.0
    %402 = vmatpush1.msra.mxu0 0.0
    %403 = vmatprep.subr.mxu0 0.0
    %404 = vmatpush1.msra.mxu0 0.0
    %405 = vmatprep.subr.mxu0 0.0
    %406 = vmatpush1.msra.mxu0 0.0
    %407 = vmatprep.subr.mxu0 0.0
    %408 = vmatpush1.msra.mxu0 0.0
    %409 = vmatprep.subr.mxu0 0.0
    %410 = vmatpush1.msra.mxu0 0.0
    %411 = vmatprep.subr.mxu0 0.0
    %412 = vmatpush1.msra.mxu0 0.0
    %413 = vmatprep.subr.mxu0 0.0
    %414 = vmatpush1.msra.mxu0 0.0
    %415 = vmatprep.subr.mxu0 0.0
    %416 = vmatpush1.msra.mxu0 0.0
    %417 = vmatprep.subr.mxu0 0.0
    %418 = vmatpush1.msra.mxu0 0.0
    %419 = vmatprep.subr.mxu0 0.0
    %420 = vmatpush1.msra.mxu0 0.0
    %421 = vmatprep.subr.mxu0 0.0
    %422 = vmatpush1.msra.mxu0 0.0
    %423 = vmatprep.subr.mxu0 0.0
    %424 = vmatpush1.msra.mxu0 0.0
    %425 = vmatprep.subr.mxu0 0.0
    %426 = vmatpush1.msra.mxu0 0.0
    %427 = vmatprep.subr.mxu0 0.0
    %428 = vmatpush1.msra.mxu0 0.0
    %429 = vmatprep.mubr.f32.mxu0 0.0
    %430 = vmatmul.mubr.f32.gmra.mrb[0].mxu0 %v363
    %v431 = vpop.f32.mrb[0].mxu0
    %v432 = vadd.f32 %v360, %v431
    %v433 = vpop.f32.mrb[0].mxu0
    %434 = vdwg.mxu0
    %vm435 = vcmp.gt.f32.partialorder %v432, 0.0
    %v436 = vmul.f32 %v432, 0.2
    %v437 = vsel %vm435, %v432, %v436
    %v438 = vld [vmem:[#allocation14] sm:$0xff]
    %v439 = vld [vmem:[#allocation14 + $0x8] sm:$0xff]
    %v440 = vld [vmem:[#allocation14 + $0x10] sm:$0xff]
    %v441 = vld [vmem:[#allocation14 + $0x18] sm:$0xff]
    %v442 = vld [vmem:[#allocation16] sm:$0x1]
    %v444 = vlaneseq
    %v445 = vshrl.u32 %v444, 7
    %v446 = vsub.s32 0, %v445
    %v447 = vrot.slane %v442, %v446
    %v450 = vsel %vm274, %v437, 0
    %452 = vmatprep.subr.mxu0 0.0
    %453 = vmatpush1.msra.mxu0 %v438
    %454 = vmatprep.subr.mxu0 0.0
    %455 = vmatpush1.msra.mxu0 %v439
    %456 = vmatprep.subr.mxu0 0.0
    %457 = vmatpush1.msra.mxu0 %v440
    %458 = vmatprep.subr.mxu0 0.0
    %459 = vmatpush1.msra.mxu0 %v441
    %460 = vmatprep.subr.mxu0 0.0
    %461 = vmatpush1.msra.mxu0 0.0
    %462 = vmatprep.subr.mxu0 0.0
    %463 = vmatpush1.msra.mxu0 0.0
    %464 = vmatprep.subr.mxu0 0.0
    %465 = vmatpush1.msra.mxu0 0.0
    %466 = vmatprep.subr.mxu0 0.0
    %467 = vmatpush1.msra.mxu0 0.0
    %468 = vmatprep.subr.mxu0 0.0
    %469 = vmatpush1.msra.mxu0 0.0
    %470 = vmatprep.subr.mxu0 0.0
    %471 = vmatpush1.msra.mxu0 0.0
    %472 = vmatprep.subr.mxu0 0.0
    %473 = vmatpush1.msra.mxu0 0.0
    %474 = vmatprep.subr.mxu0 0.0
    %475 = vmatpush1.msra.mxu0 0.0
    %476 = vmatprep.subr.mxu0 0.0
    %477 = vmatpush1.msra.mxu0 0.0
    %478 = vmatprep.subr.mxu0 0.0
    %479 = vmatpush1.msra.mxu0 0.0
    %480 = vmatprep.subr.mxu0 0.0
    %481 = vmatpush1.msra.mxu0 0.0
    %482 = vmatprep.subr.mxu0 0.0
    %483 = vmatpush1.msra.mxu0 0.0
    %484 = vmatprep.subr.mxu0 0.0
    %485 = vmatpush1.msra.mxu0 0.0
    %486 = vmatprep.subr.mxu0 0.0
    %487 = vmatpush1.msra.mxu0 0.0
    %488 = vmatprep.subr.mxu0 0.0
    %489 = vmatpush1.msra.mxu0 0.0
    %490 = vmatprep.subr.mxu0 0.0
    %491 = vmatpush1.msra.mxu0 0.0
    %492 = vmatprep.subr.mxu0 0.0
    %493 = vmatpush1.msra.mxu0 0.0
    %494 = vmatprep.subr.mxu0 0.0
    %495 = vmatpush1.msra.mxu0 0.0
    %496 = vmatprep.subr.mxu0 0.0
    %497 = vmatpush1.msra.mxu0 0.0
    %498 = vmatprep.subr.mxu0 0.0
    %499 = vmatpush1.msra.mxu0 0.0
    %500 = vmatprep.subr.mxu0 0.0
    %501 = vmatpush1.msra.mxu0 0.0
    %502 = vmatprep.subr.mxu0 0.0
    %503 = vmatpush1.msra.mxu0 0.0
    %504 = vmatprep.subr.mxu0 0.0
    %505 = vmatpush1.msra.mxu0 0.0
    %506 = vmatprep.subr.mxu0 0.0
    %507 = vmatpush1.msra.mxu0 0.0
    %508 = vmatprep.subr.mxu0 0.0
    %509 = vmatpush1.msra.mxu0 0.0
    %510 = vmatprep.subr.mxu0 0.0
    %511 = vmatpush1.msra.mxu0 0.0
    %512 = vmatprep.subr.mxu0 0.0
    %513 = vmatpush1.msra.mxu0 0.0
    %514 = vmatprep.subr.mxu0 0.0
    %515 = vmatpush1.msra.mxu0 0.0
    %516 = vmatprep.mubr.f32.mxu0 0.0
    %517 = vmatmul.mubr.f32.gmra.mrb[0].mxu0 %v450
    %v518 = vpop.f32.mrb[0].mxu0
    %v519 = vadd.f32 %v447, %v518
    %v520 = vpop.f32.mrb[0].mxu0
    %521 = vdwg.mxu0
    %vm522 = vcmp.gt.f32.partialorder %v519, 0.0
    %v523 = vmul.f32 %v519, 0.2
    %v524 = vsel %vm522, %v519, %v523
    %v525 = vld [vmem:[#allocation17] sm:$0xff]
    %v526 = vld [vmem:[#allocation17 + $0x8] sm:$0xff]
    %v527 = vld [vmem:[#allocation17 + $0x10] sm:$0xff]
    %v528 = vld [vmem:[#allocation17 + $0x18] sm:$0xff]
    %v529 = vld [vmem:[#allocation19] sm:$0x1]
    %v531 = vlaneseq
    %v532 = vshrl.u32 %v531, 7
    %v533 = vsub.s32 0, %v532
    %v534 = vrot.slane %v529, %v533
    %v537 = vsel %vm274, %v524, 0
    %539 = vmatprep.subr.mxu0 0.0
    %540 = vmatpush1.msra.mxu0 %v525
    %541 = vmatprep.subr.mxu0 0.0
    %542 = vmatpush1.msra.mxu0 %v526
    %543 = vmatprep.subr.mxu0 0.0
    %544 = vmatpush1.msra.mxu0 %v527
    %545 = vmatprep.subr.mxu0 0.0
    %546 = vmatpush1.msra.mxu0 %v528
    %547 = vmatprep.subr.mxu0 0.0
    %548 = vmatpush1.msra.mxu0 0.0
    %549 = vmatprep.subr.mxu0 0.0
    %550 = vmatpush1.msra.mxu0 0.0
    %551 = vmatprep.subr.mxu0 0.0
    %552 = vmatpush1.msra.mxu0 0.0
    %553 = vmatprep.subr.mxu0 0.0
    %554 = vmatpush1.msra.mxu0 0.0
    %555 = vmatprep.subr.mxu0 0.0
    %556 = vmatpush1.msra.mxu0 0.0
    %557 = vmatprep.subr.mxu0 0.0
    %558 = vmatpush1.msra.mxu0 0.0
    %559 = vmatprep.subr.mxu0 0.0
    %560 = vmatpush1.msra.mxu0 0.0
    %561 = vmatprep.subr.mxu0 0.0
    %562 = vmatpush1.msra.mxu0 0.0
    %563 = vmatprep.subr.mxu0 0.0
    %564 = vmatpush1.msra.mxu0 0.0
    %565 = vmatprep.subr.mxu0 0.0
    %566 = vmatpush1.msra.mxu0 0.0
    %567 = vmatprep.subr.mxu0 0.0
    %568 = vmatpush1.msra.mxu0 0.0
    %569 = vmatprep.subr.mxu0 0.0
    %570 = vmatpush1.msra.mxu0 0.0
    %571 = vmatprep.subr.mxu0 0.0
    %572 = vmatpush1.msra.mxu0 0.0
    %573 = vmatprep.subr.mxu0 0.0
    %574 = vmatpush1.msra.mxu0 0.0
    %575 = vmatprep.subr.mxu0 0.0
    %576 = vmatpush1.msra.mxu0 0.0
    %577 = vmatprep.subr.mxu0 0.0
    %578 = vmatpush1.msra.mxu0 0.0
    %579 = vmatprep.subr.mxu0 0.0
    %580 = vmatpush1.msra.mxu0 0.0
    %581 = vmatprep.subr.mxu0 0.0
    %582 = vmatpush1.msra.mxu0 0.0
    %583 = vmatprep.subr.mxu0 0.0
    %584 = vmatpush1.msra.mxu0 0.0
    %585 = vmatprep.subr.mxu0 0.0
    %586 = vmatpush1.msra.mxu0 0.0
    %587 = vmatprep.subr.mxu0 0.0
    %588 = vmatpush1.msra.mxu0 0.0
    %589 = vmatprep.subr.mxu0 0.0
    %590 = vmatpush1.msra.mxu0 0.0
    %591 = vmatprep.subr.mxu0 0.0
    %592 = vmatpush1.msra.mxu0 0.0
    %593 = vmatprep.subr.mxu0 0.0
    %594 = vmatpush1.msra.mxu0 0.0
    %595 = vmatprep.subr.mxu0 0.0
    %596 = vmatpush1.msra.mxu0 0.0
    %597 = vmatprep.subr.mxu0 0.0
    %598 = vmatpush1.msra.mxu0 0.0
    %599 = vmatprep.subr.mxu0 0.0
    %600 = vmatpush1.msra.mxu0 0.0
    %601 = vmatprep.subr.mxu0 0.0
    %602 = vmatpush1.msra.mxu0 0.0
    %603 = vmatprep.mubr.f32.mxu0 0.0
    %604 = vmatmul.mubr.f32.gmra.mrb[0].mxu0 %v537
    %v605 = vpop.f32.mrb[0].mxu0
    %v606 = vadd.f32 %v534, %v605
    %v607 = vpop.f32.mrb[0].mxu0
    %608 = vdwg.mxu0
    %v609 = vxor.u32 %v606, 2147483648
    %v610 = vmul.f32 %v609, 1.442695
    %v611 = vpow.pop %v610
    %v612 = vadd.f32 %v611, 1.0
    %v613 = vrcp.pop %v612
    %v614 = vmul.f32 1.0, %v613
    %615 = vst [vmem:[#allocation20] sm:$0xff] %v614
    // Predicated region
    $region90: #{decoder_forward.1} parent=1 // pred_check
      _
    $region91: #{decoder_forward.1} parent=1 // pred_check_branch
      %617 = sbr.rel (0) target = $region93
    $region92: #{decoder_forward.1} parent=1 // pred_region
      %s619 = ssub.s32 128, 128
      %620 = vsyncadd [#allocation4], %s619
      %s622 = sshll.u32 [#allocation20], 4
      %s623 = int_to_ptr.vmem [resolvable:$true] %s622
      %625 = dma.vmem_to_hbm [thread:$0]  %s623, 128, %s11, [#allocation4]
    $region93: #{decoder_forward.1} parent=1 // pred_fallthru
      _
    // Predicated region
    $region94: #{decoder_forward.1} parent=1 // pred_check
      _
    $region95: #{decoder_forward.1} parent=1 // pred_check_branch
      %627 = sbr.rel (0) target = $region97
    $region96: #{decoder_forward.1} parent=1 // pred_region
      %628 = dma.done [#allocation4], 128
    $region97: #{decoder_forward.1} parent=1 // pred_fallthru
      _
    %629 = vsyncpa [#allocation3], 1
    %630 = vsyncpa [#allocation6], 1
    %631 = vsyncpa [#allocation9], 1
    %632 = vsyncpa [#allocation12], 1
    %633 = vsyncpa [#allocation15], 1
    %634 = vsyncpa [#allocation18], 1
    %635 = vsyncpa [#allocation4], 1

</llo_original>
